<compile_context>
chip_gen: v7x
topology: tpu7x:2x2x1
jax: 0.10.0
libtpu: 0.0.40
codegen_flags: <defaults>
</compile_context>

<pallas_src>
import functools

import jax
import jax.numpy as jnp
from jax.experimental import pallas as pl
from jax.experimental.pallas import tpu as pltpu


def _round_up(x, m):
    return ((x + m - 1) // m) * m


_TM_CAP = 1024  # diminishing returns past ~512-1024 rows per tile


def _vmem_budgets():
    """Generation-aware (tile_budget, scoped_vmem_limit) in bytes.

    v5e/v6e: 128 MiB VMEM per TensorCore; v7x: 64 MiB. Fall back to the
    v7x-safe numbers if the hardware query is unavailable.
    """
    cap = 64 * 1024 * 1024
    try:
        info = pltpu.get_tpu_info()
        cap = int(getattr(info, "vmem_capacity_bytes", cap)) or cap
    except Exception:
        pass
    if cap >= 96 * 1024 * 1024:                   # v5e / v6e (128 MiB VMEM)
        return 80 * 1024 * 1024, 100 * 1024 * 1024
    return 36 * 1024 * 1024, 48 * 1024 * 1024     # v7x (64 MiB / TC)


def _pick_tiles(m, k, n_pad, x_isize, w_isize, b_isize, out_isize, budget):
    """Pick (TM, TN). The auto-pipeline double-buffers every input/output
    BlockSpec, so every block is counted 2x here."""
    # 1) TN: largest multiple of 128 whose (double-buffered) weight+bias block
    #    stays within half the budget, leaving the rest for the x/out stream.
    tn = n_pad
    while tn > 128 and 2 * tn * (k * w_isize + b_isize) > budget // 2:
        tn = max(128, _round_up(tn // 2, 128))
    # TODO(synk): if even TN=128 blows the budget (enormous K), add a
    # K-reduction grid axis with an f32 VMEM accumulator.
    resident = 2 * tn * (k * w_isize + b_isize)

    # 2) TM from what is left: double-buffered x row (K) + out row (TN).
    per_row = 2 * (k * x_isize + tn * out_isize)
    avail = max(budget - resident, 8 * per_row)
    tm = min(_TM_CAP, avail // per_row)
    if tm >= 128:
        tm = (tm // 128) * 128      # MXU / (8,128) vreg friendly alignment
    else:
        tm = max(8, (tm // 8) * 8)

    # 3) Guarantee >=2 grid steps along M when there is enough work so v7x can
    #    shard the 'parallel' axis across both TCs and DMA overlaps compute.
    if m >= 256:
        tm = min(tm, max(128, _round_up(-(-m // 2), 128)))

    # 4) Small inputs: a single full-extent block (legal for any M when the
    #    block dim equals the full array dim).
    if m <= tm:
        tm = m
    return tm, tn


def gate_kernel(x_ref, w_ref, b_ref, o_ref, *, compute_dtype):
    # x_ref: (TM, K)  w_ref: (K, TN)  b_ref: (1, TN)  o_ref: (TM, TN)
    x = x_ref[...]
    w = w_ref[...]
    if compute_dtype is not None:
        # Cast in VMEM (cheap VPU work) rather than a separate XLA pass in HBM.
        x = x.astype(compute_dtype)
        w = w.astype(compute_dtype)
    acc = jnp.dot(x, w, preferred_element_type=jnp.float32)
    o_ref[...] = (acc + b_ref[...].astype(jnp.float32)).astype(o_ref.dtype)


def pad_gate_params(weight_t, bias):
    """Pad weight (in_dim, out_dim) / bias (out_dim,) to a lane-dense multiple
    of 128 along N. Call ONCE at parameter-setup time, not per forward call."""
    in_dim, out_dim = weight_t.shape
    n_pad = _round_up(out_dim, 128)
    if n_pad != out_dim:
        weight_t = jnp.pad(weight_t, ((0, 0), (0, n_pad - out_dim)))
        bias = jnp.pad(bias, (0, n_pad - out_dim))
    return weight_t, bias.reshape(1, n_pad), out_dim


def gate_forward(x, weight_t, bias2d, out_dim, compute_dtype=None):
    """y = x @ weight_t + bias over the last axis of x.

    x        : (..., input_dim)
    weight_t : (input_dim, n_pad)  pre-padded (n_pad a multiple of 128)
    bias2d   : (1, n_pad)          pre-padded
    out_dim  : true output dim (<= n_pad); padded columns are sliced off.
    compute_dtype : optional MXU operand dtype (e.g. jnp.bfloat16); cast is
                    done inside the kernel, accumulation stays f32.
    """
    in_dim, n_pad = weight_t.shape
    lead_shape = x.shape[:-1]
    m = 1
    for d in lead_shape:
        m *= d
    x2d = x.reshape(m, in_dim)
    out_dtype = x.dtype

    x_isize = jnp.dtype(x2d.dtype).itemsize
    w_isize = jnp.dtype(weight_t.dtype).itemsize
    b_isize = jnp.dtype(bias2d.dtype).itemsize
    out_isize = jnp.dtype(out_dtype).itemsize

    tile_budget, vmem_limit = _vmem_budgets()
    tm, tn = _pick_tiles(m, in_dim, n_pad, x_isize, w_isize, b_isize,
                         out_isize, tile_budget)

    # Ragged last tiles are handled by Pallas: no jnp.pad of x along M and no
    # output row-slice copy afterwards.
    grid = (pl.cdiv(m, tm), pl.cdiv(n_pad, tn))

    cost = pl.CostEstimate(
        flops=2 * m * in_dim * n_pad,
        transcendentals=0,
        bytes_accessed=(m * in_dim * x_isize
                        + in_dim * n_pad * w_isize
                        + n_pad * b_isize
                        + m * n_pad * out_isize),
    )

    out = pl.pallas_call(
        functools.partial(gate_kernel, compute_dtype=compute_dtype),
        out_shape=jax.ShapeDtypeStruct((m, n_pad), out_dtype),
        grid_spec=pl.GridSpec(
            grid=grid,
            in_specs=[
                # x tile marches along M, re-used across the (inner) N axis.
                pl.BlockSpec((tm, in_dim), lambda i, j: (i, 0)),
                # weight / bias: constant along M, stream along N
                # (fully VMEM-resident whenever TN == n_pad).
                pl.BlockSpec((in_dim, tn), lambda i, j: (0, j)),
                pl.BlockSpec((1, tn), lambda i, j: (0, j)),
            ],
            out_specs=pl.BlockSpec((tm, tn), lambda i, j: (i, j)),
        ),
        compiler_params=pltpu.CompilerParams(
            # Independent output tiles: both axes shardable across v7x's 2 TCs.
            dimension_semantics=("parallel", "parallel"),
            vmem_limit_bytes=vmem_limit,
        ),
        cost_estimate=cost,
    )(x2d, weight_t, bias2d)

    if n_pad != out_dim:
        out = out[:, :out_dim]
    return out.reshape(lead_shape + (out_dim,))


def init_gate_params(key, input_dim, output_dim, dtype=jnp.float32):
    """Deterministic init mirroring nn.Linear default (uniform +-1/sqrt(in))."""
    k_w, k_b = jax.random.split(key)
    bound = 1.0 / (input_dim ** 0.5)
    # PyTorch Linear weight is (out, in); store transposed (in, out) here.
    weight_t = jax.random.uniform(
        k_w, (input_dim, output_dim), dtype=dtype, minval=-bound, maxval=bound
    )
    bias = jax.random.uniform(
        k_b, (output_dim,), dtype=dtype, minval=-bound, maxval=bound
    )
    return weight_t, bias


if __name__ == "__main__":
    key = jax.random.PRNGKey(0)
    k_x, k_p = jax.random.split(key)

    batch, seq, input_dim, output_dim = 2, 8, 32, 32
    x = jax.random.normal(k_x, (batch, seq, input_dim), dtype=jnp.float32)
    weight_t, bias = init_gate_params(k_p, input_dim, output_dim)

    # Pad parameters ONCE, outside the hot path.
    weight_p, bias_p, out_dim = pad_gate_params(weight_t, bias)

    y = gate_forward(x, weight_p, bias_p, out_dim)
    y = jax.block_until_ready(y)

    # Reference check in plain JAX (f32 compute path -> tight tolerance).
    y_ref = x @ weight_t + bias
    assert y.shape == (batch, seq, output_dim)
    assert jnp.allclose(y, y_ref, atol=1e-5, rtol=1e-5)

    print("KERNEL_OK")
</pallas_src>

<mosaic_0001>
module attributes {stable_mosaic.version = 11 : i64} {
  func.func @gate_kernel(%arg0: i32, %arg1: i32, %arg2: memref<16x32xf32, #tpu.memory_space<vmem>>, %arg3: memref<32x128xf32, #tpu.memory_space<vmem>>, %arg4: memref<1x128xf32, #tpu.memory_space<vmem>>, %arg5: memref<16x128xf32, #tpu.memory_space<vmem>>) attributes {dimension_semantics = [#tpu.dimension_semantics<parallel>, #tpu.dimension_semantics<parallel>], iteration_bounds = array<i64: 1, 1>, scalar_prefetch = 0 : i64, scratch_operands = 0 : i64, tpu.core_type = #tpu.core_type<tc>, window_params = [{transform_indices = @transform_0, window_bounds = array<i64: 16, 32>}, {transform_indices = @transform_1, window_bounds = array<i64: 32, 128>}, {transform_indices = @transform_2, window_bounds = array<i64: 1, 128>}, {transform_indices = @transform_3, window_bounds = array<i64: 16, 128>}]} {
    %c0 = arith.constant 0 : index
    %c0_0 = arith.constant 0 : index
    %0 = vector.load %arg2[%c0, %c0_0] : memref<16x32xf32, #tpu.memory_space<vmem>>, vector<16x32xf32>
    %c0_1 = arith.constant 0 : index
    %c0_2 = arith.constant 0 : index
    %1 = vector.load %arg3[%c0_1, %c0_2] : memref<32x128xf32, #tpu.memory_space<vmem>>, vector<32x128xf32>
    %cst = arith.constant dense<0.000000e+00> : vector<16x128xf32>
    %2 = tpu.matmul %0, %1, %cst {dimension_numbers = #tpu.dot_dimension_numbers<[1], [0], [0], [1], [0, 0, 1, 1], [], []>} : vector<16x32xf32>, vector<32x128xf32>, vector<16x128xf32> -> vector<16x128xf32>
    %c0_3 = arith.constant 0 : index
    %c0_4 = arith.constant 0 : index
    %3 = vector.load %arg4[%c0_3, %c0_4] : memref<1x128xf32, #tpu.memory_space<vmem>>, vector<1x128xf32>
    %4 = vector.broadcast %3 : vector<1x128xf32> to vector<16x128xf32>
    %5 = arith.addf %2, %4 : vector<16x128xf32>
    %c0_5 = arith.constant 0 : index
    %c0_6 = arith.constant 0 : index
    %6 = vector.load %arg5[%c0_5, %c0_6] : memref<16x128xf32, #tpu.memory_space<vmem>>, vector<16x128xf32>
    tpu.vector_store %arg5[%c0_5, %c0_6], %5 {strides = array<i32>} : memref<16x128xf32, #tpu.memory_space<vmem>>, vector<16x128xf32>,
    return
  }
  func.func @transform_0(%arg0: i32, %arg1: i32) -> (i32, i32) {
    %c0_i32 = arith.constant 0 : i32
    %c0_i32_0 = arith.constant 0 : i32
    return %arg0, %c0_i32 : i32, i32
  }
  func.func @transform_1(%arg0: i32, %arg1: i32) -> (i32, i32) {
    %c0_i32 = arith.constant 0 : i32
    %c0_i32_0 = arith.constant 0 : i32
    return %c0_i32, %arg1 : i32, i32
  }
  func.func @transform_2(%arg0: i32, %arg1: i32) -> (i32, i32) {
    %c0_i32 = arith.constant 0 : i32
    %c0_i32_0 = arith.constant 0 : i32
    return %c0_i32, %arg1 : i32, i32
  }
  func.func @transform_3(%arg0: i32, %arg1: i32) -> (i32, i32) {
    %c0_i32 = arith.constant 0 : i32
    return %arg0, %arg1 : i32, i32
  }
}

</mosaic_0001>

<llo_original>
// kernel: tpu_custom_call.1
$region0: #{tpu_custom_call.1}
  #allocation0 [shape = 'u32[]', space=smem, size = 0x4, offset = 0x4, fixed_abs, tag = 'smem constant byte address 0x4 - core index']
  #allocation1 [shape = 'u32[144,128]{1,0:T(1,128)}', space=vmem, size = 0x12000, scoped, tag = 'internal scratch']
  %s0 = inlined_call_operand.hbm [shape: f32[16,32], index: 0, kind: input, shape index: {}]
  %s1 = inlined_call_operand.hbm [shape: f32[32,128], index: 1, kind: input, shape index: {}]
  %s2 = inlined_call_operand.vmem [shape: f32[1,128], index: 2, kind: input, shape index: {}]
  %s3 = inlined_call_operand.hbm [shape: f32[16,128], index: 3, kind: output, shape index: {}]
  %s4 = sld [smem:[#allocation0]]
  $region30: #{tpu_custom_call.1} parent=0
    _
  %s6 = ssub.s32 1, %s4
  %s7 = scalar_select 0, %s6, %s4
  $region1: #{tpu_custom_call.1} parent=0
    #allocation2 [shape = 'u8[8192]{0}', space=vmem, size = 0x2000, scoped, tag = 'input window, operand 0, single buffered']
    #allocation3 [shape = 's32[1]{0}', space=sflag, size = 0x4, scoped, tag = 'scoped memory for tpu_custom_call.1']
    #allocation4 [shape = 's32[1]{0}', space=sflag, size = 0x4, scoped, tag = 'scoped memory for tpu_custom_call.1']
    #allocation5 [shape = 'u8[16384]{0}', space=vmem, size = 0x4000, scoped, tag = 'input window, operand 1, single buffered']
    #allocation6 [shape = 's32[1]{0}', space=sflag, size = 0x4, scoped, tag = 'scoped memory for tpu_custom_call.1']
    #allocation7 [shape = 'u8[8192]{0}', space=vmem, size = 0x2000, scoped, tag = 'output window, operand 0, single buffered']
    %8 = vsyncpa [#allocation3], 0
    %9 = vsyncpa [#allocation6], 0
    %10 = vsyncpa [#allocation4], 0
    // Predicated region
    $region2: #{tpu_custom_call.1} parent=1 // pred_check
      _
    $region3: #{tpu_custom_call.1} parent=1 // pred_check_branch
      %12 = sbr.rel (0) target = $region5
    $region4: #{tpu_custom_call.1} parent=1 // pred_region
      %s14 = ssub.s32 256, 256
      %15 = vsyncadd [#allocation3], %s14
      %s16 = sshll.u32 [#allocation2], 4
      %s17 = int_to_ptr.vmem [resolvable:$true] %s16
      %22 = dma.hbm_to_vmem [thread:$0]  %s0, 256, %s17, [#allocation3], 128, 128, 8
    $region5: #{tpu_custom_call.1} parent=1 // pred_fallthru
      _
    // Predicated region
    $region6: #{tpu_custom_call.1} parent=1 // pred_check
      _
    $region7: #{tpu_custom_call.1} parent=1 // pred_check_branch
      %24 = sbr.rel (0) target = $region9
    $region8: #{tpu_custom_call.1} parent=1 // pred_region
      %s26 = ssub.s32 512, 512
      %27 = vsyncadd [#allocation6], %s26
      %s28 = sshll.u32 [#allocation5], 4
      %s29 = int_to_ptr.vmem [resolvable:$true] %s28
      %34 = dma.hbm_to_vmem [thread:$0]  %s1, 512, %s29, [#allocation6], 128, 128, 8
    $region9: #{tpu_custom_call.1} parent=1 // pred_fallthru
      _
    // Predicated region
    $region10: #{tpu_custom_call.1} parent=1 // pred_check
      _
    $region11: #{tpu_custom_call.1} parent=1 // pred_check_branch
      %36 = sbr.rel (0) target = $region13
    $region12: #{tpu_custom_call.1} parent=1 // pred_region
      _
    $region13: #{tpu_custom_call.1} parent=1 // pred_fallthru
      _
    // Predicated region
    $region14: #{tpu_custom_call.1} parent=1 // pred_check
      _
    $region15: #{tpu_custom_call.1} parent=1 // pred_check_branch
      %38 = sbr.rel (0) target = $region17
    $region16: #{tpu_custom_call.1} parent=1 // pred_region
      %39 = dma.done [#allocation3], 256
    $region17: #{tpu_custom_call.1} parent=1 // pred_fallthru
      _
    // Predicated region
    $region18: #{tpu_custom_call.1} parent=1 // pred_check
      _
    $region19: #{tpu_custom_call.1} parent=1 // pred_check_branch
      %41 = sbr.rel (0) target = $region21
    $region20: #{tpu_custom_call.1} parent=1 // pred_region
      %42 = dma.done [#allocation6], 512
    $region21: #{tpu_custom_call.1} parent=1 // pred_fallthru
      _
    %v43 = vld [vmem:[#allocation2] sm:$0xff]
    %v44 = vld [vmem:[#allocation2 + $0x8] sm:$0xff]
    %v45 = vld [vmem:[#allocation5] sm:$0xff]
    %v46 = vld [vmem:[#allocation5 + $0x8] sm:$0xff]
    %v47 = vld [vmem:[#allocation5 + $0x10] sm:$0xff]
    %v48 = vld [vmem:[#allocation5 + $0x18] sm:$0xff]
    %v49 = vld [vmem:[%s2] sm:$0x1]
    %v51 = vlaneseq
    %v52 = vshrl.u32 %v51, 7
    %v53 = vsub.s32 0, %v52
    %v54 = vrot.slane %v49, %v53
    %vm56 = vcmask 261120
    %v58 = vsel %vm56, %v43, 0
    %v61 = vsel %vm56, %v44, 0
    %63 = vmatprep.subr.mxu0 0.0
    %64 = vmatpush1.msra.mxu0 %v45
    %65 = vmatprep.subr.mxu0 0.0
    %66 = vmatpush1.msra.mxu0 %v46
    %67 = vmatprep.subr.mxu0 0.0
    %68 = vmatpush1.msra.mxu0 %v47
    %69 = vmatprep.subr.mxu0 0.0
    %70 = vmatpush1.msra.mxu0 %v48
    %71 = vmatprep.subr.mxu0 0.0
    %72 = vmatpush1.msra.mxu0 0.0
    %73 = vmatprep.subr.mxu0 0.0
    %74 = vmatpush1.msra.mxu0 0.0
    %75 = vmatprep.subr.mxu0 0.0
    %76 = vmatpush1.msra.mxu0 0.0
    %77 = vmatprep.subr.mxu0 0.0
    %78 = vmatpush1.msra.mxu0 0.0
    %79 = vmatprep.subr.mxu0 0.0
    %80 = vmatpush1.msra.mxu0 0.0
    %81 = vmatprep.subr.mxu0 0.0
    %82 = vmatpush1.msra.mxu0 0.0
    %83 = vmatprep.subr.mxu0 0.0
    %84 = vmatpush1.msra.mxu0 0.0
    %85 = vmatprep.subr.mxu0 0.0
    %86 = vmatpush1.msra.mxu0 0.0
    %87 = vmatprep.subr.mxu0 0.0
    %88 = vmatpush1.msra.mxu0 0.0
    %89 = vmatprep.subr.mxu0 0.0
    %90 = vmatpush1.msra.mxu0 0.0
    %91 = vmatprep.subr.mxu0 0.0
    %92 = vmatpush1.msra.mxu0 0.0
    %93 = vmatprep.subr.mxu0 0.0
    %94 = vmatpush1.msra.mxu0 0.0
    %95 = vmatprep.subr.mxu0 0.0
    %96 = vmatpush1.msra.mxu0 0.0
    %97 = vmatprep.subr.mxu0 0.0
    %98 = vmatpush1.msra.mxu0 0.0
    %99 = vmatprep.subr.mxu0 0.0
    %100 = vmatpush1.msra.mxu0 0.0
    %101 = vmatprep.subr.mxu0 0.0
    %102 = vmatpush1.msra.mxu0 0.0
    %103 = vmatprep.subr.mxu0 0.0
    %104 = vmatpush1.msra.mxu0 0.0
    %105 = vmatprep.subr.mxu0 0.0
    %106 = vmatpush1.msra.mxu0 0.0
    %107 = vmatprep.subr.mxu0 0.0
    %108 = vmatpush1.msra.mxu0 0.0
    %109 = vmatprep.subr.mxu0 0.0
    %110 = vmatpush1.msra.mxu0 0.0
    %111 = vmatprep.subr.mxu0 0.0
    %112 = vmatpush1.msra.mxu0 0.0
    %113 = vmatprep.subr.mxu0 0.0
    %114 = vmatpush1.msra.mxu0 0.0
    %115 = vmatprep.subr.mxu0 0.0
    %116 = vmatpush1.msra.mxu0 0.0
    %117 = vmatprep.subr.mxu0 0.0
    %118 = vmatpush1.msra.mxu0 0.0
    %119 = vmatprep.subr.mxu0 0.0
    %120 = vmatpush1.msra.mxu0 0.0
    %121 = vmatprep.subr.mxu0 0.0
    %122 = vmatpush1.msra.mxu0 0.0
    %123 = vmatprep.subr.mxu0 0.0
    %124 = vmatpush1.msra.mxu0 0.0
    %125 = vmatprep.subr.mxu0 0.0
    %126 = vmatpush1.msra.mxu0 0.0
    %127 = vmatprep.mubr.f32.mxu0 0.0
    %128 = vmatmul.mubr.f32.gmra.mrb[0].mxu0 %v58
    %v129 = vpop.f32.mrb[0].mxu0
    %v130 = vadd.f32 %v54, %v129
    %v131 = vpop.f32.mrb[0].mxu0
    %132 = vmatprep.mubr.f32.mxu0 0.0
    %133 = vmatmul.mubr.f32.gmra.mrb[0].mxu0 %v61
    %v134 = vpop.f32.mrb[0].mxu0
    %v135 = vadd.f32 %v54, %v134
    %v136 = vpop.f32.mrb[0].mxu0
    %137 = vdwg.mxu0
    %138 = vst [vmem:[#allocation7] sm:$0xff] %v130
    %139 = vst [vmem:[#allocation7 + $0x8] sm:$0xff] %v135
    // Predicated region
    $region22: #{tpu_custom_call.1} parent=1 // pred_check
      _
    $region23: #{tpu_custom_call.1} parent=1 // pred_check_branch
      %141 = sbr.rel (0) target = $region25
    $region24: #{tpu_custom_call.1} parent=1 // pred_region
      %s143 = ssub.s32 256, 256
      %144 = vsyncadd [#allocation4], %s143
      %s145 = sshll.u32 [#allocation7], 4
      %s146 = int_to_ptr.vmem [resolvable:$true] %s145
      %151 = dma.vmem_to_hbm [thread:$0]  %s146, 256, %s3, [#allocation4], 128, 128, 8
    $region25: #{tpu_custom_call.1} parent=1 // pred_fallthru
      _
    // Predicated region
    $region26: #{tpu_custom_call.1} parent=1 // pred_check
      _
    $region27: #{tpu_custom_call.1} parent=1 // pred_check_branch
      %153 = sbr.rel (0) target = $region29
    $region28: #{tpu_custom_call.1} parent=1 // pred_region
      %154 = dma.done [#allocation4], 256
    $region29: #{tpu_custom_call.1} parent=1 // pred_fallthru
      _
    %155 = vsyncpa [#allocation3], 1
    %156 = vsyncpa [#allocation6], 1
    %157 = vsyncpa [#allocation4], 1

</llo_original>
